<compile_context>
chip_gen: v5e
topology: v5e:2x2
jax: 0.10.0
libtpu: 0.0.40
codegen_flags: <defaults>
</compile_context>

<pallas_src>
from functools import partial

import jax
import jax.numpy as jnp
from jax import lax
from jax.experimental import pallas as pl
from jax.experimental.pallas import tpu as pltpu

_EPS = 1e-12  # matches torch.nn.functional.normalize default eps


def _round_up(x, m):
    return ((x + m - 1) // m) * m


def _scaled_normalize(x, extra_scale, out_dtype):
    """torch.F.normalize semantics (x / max(||x||, eps)) with an extra scale
    folded in (used to absorb 1/temperature into the query operand).  The
    scale is computed in f32 via one EUP rsqrt per row; the result is cast
    back to `out_dtype` so the MXU sees bf16 operands when inputs are bf16."""
    xf = x.astype(jnp.float32)
    ssq = jnp.sum(xf * xf, axis=-1, keepdims=True)
    inv = lax.rsqrt(jnp.maximum(ssq, _EPS * _EPS)) * extra_scale
    return (xf * inv).astype(out_dtype)


def _infonce_kernel(q_ref, prow_ref, key_ref, nll_ref,
                    qn_ref, sum_ref, pos_ref, *,
                    inv_t, tile_k, valid_k, mask_keys, self_mode):
    """Online (flash-style) softmax cross-entropy over key tiles.

    grid = (query_tiles [parallel], key_tiles [arbitrary]).
    Because every row is L2-normalized, |logit| <= 1/T, so the logsumexp uses
    the constant max C = 1/T (no per-row XLU max reduce, no serialization
    between max and exp).
    """
    ki = pl.program_id(1)

    @pl.when(ki == 0)
    def _init():
        # Normalize the query tile once per query block (1/T folded in).
        qn = _scaled_normalize(q_ref[...], inv_t, qn_ref.dtype)
        qn_ref[...] = qn
        pn = _scaled_normalize(prow_ref[...], 1.0, jnp.float32)
        pos = jnp.sum(qn.astype(jnp.float32) * pn, axis=-1, keepdims=True)
        pos_ref[...] = pos
        if self_mode:
            # The diagonal target is already part of the key tiles.
            sum_ref[...] = jnp.zeros_like(sum_ref)
        else:
            # unpaired: the positive logit is column 0 of the logits.
            sum_ref[...] = jnp.exp(pos - inv_t)

    # MXU: contract the last dim of both operands (no explicit transpose).
    kn = _scaled_normalize(key_ref[...], 1.0, qn_ref.dtype)
    s = lax.dot_general(qn_ref[...], kn, (((1,), (1,)), ((), ())),
                        preferred_element_type=jnp.float32)
    e = jnp.exp(s - inv_t)  # constant max: can only underflow (harmless)
    if mask_keys:
        # Zero out contributions from padded key rows (static python branch).
        col = lax.broadcasted_iota(jnp.int32, (1, tile_k), 1) + ki * tile_k
        e = jnp.where(col < valid_k, e, 0.0)
    sum_ref[...] += jnp.sum(e, axis=-1, keepdims=True)

    @pl.when(ki == pl.num_programs(1) - 1)
    def _finalize():
        nll_ref[...] = (jnp.log(sum_ref[...]) + inv_t) - pos_ref[...]


def info_nce_loss(query, positive_key, negative_keys=None, *,
                  temperature=0.1, reduction='mean', tq=256, tk=512):
    """Pallas implementation of InfoNCELoss.forward.

    negative_keys=None   -> in-batch negatives, labels = arange(N)
    negative_keys=(M, D) -> negative_mode='unpaired', labels = 0
    """
    if query.ndim != 2 or positive_key.ndim != 2:
        raise ValueError('<query> and <positive_key> must have 2 dimensions.')
    if query.shape[0] != positive_key.shape[0]:
        raise ValueError('<query>/<positive_key> sample count mismatch.')
    if query.shape[1] != positive_key.shape[1]:
        raise ValueError('<query>/<positive_key> embedding dim mismatch.')

    N, D = query.shape
    self_mode = negative_keys is None
    keys = positive_key if self_mode else negative_keys
    if not self_mode and (keys.ndim != 2 or keys.shape[1] != D):
        raise ValueError('<negative_keys> must be (M, D) for unpaired mode.')
    Mk = keys.shape[0]

    op_dtype = jnp.promote_types(query.dtype, keys.dtype)
    inv_t = float(1.0 / temperature)

    # Tile sizes: multiples of 8 (sublane); collapse to full extent for small
    # inputs.  Ragged N / M are padded and padded key columns are masked.
    TQ = min(tq, _round_up(N, 8))
    Np = _round_up(N, TQ)
    TK = min(tk, _round_up(Mk, 8))
    Mp = _round_up(Mk, TK)
    mask_keys = (Mp != Mk)

    def pad_rows(x, rows):
        if x.shape[0] == rows:
            return x
        return jnp.pad(x, ((0, rows - x.shape[0]), (0, 0)))

    qp = pad_rows(query, Np).astype(op_dtype)
    pp = pad_rows(positive_key, Np).astype(op_dtype)      # row-aligned positives
    kp = pad_rows(keys, Mp).astype(op_dtype)               # key / negative tiles

    grid = (Np // TQ, Mp // TK)
    itemsize = jnp.dtype(op_dtype).itemsize
    cost = pl.CostEstimate(
        flops=2 * Np * Mp * D + 6 * Np * D + 3 * Mp * D,
        transcendentals=Np * Mp + Np + Mp,
        bytes_accessed=(2 * Np * D + Mp * D) * itemsize + Np * 4,
    )

    kernel = partial(_infonce_kernel, inv_t=inv_t, tile_k=TK, valid_k=Mk,
                     mask_keys=mask_keys, self_mode=self_mode)

    nll = pl.pallas_call(
        kernel,
        out_shape=jax.ShapeDtypeStruct((Np, 1), jnp.float32),
        grid_spec=pltpu.PrefetchScalarGridSpec(
            num_scalar_prefetch=0,
            grid=grid,
            in_specs=[
                pl.BlockSpec((TQ, D), lambda qi, ki: (qi, 0)),  # query rows
                pl.BlockSpec((TQ, D), lambda qi, ki: (qi, 0)),  # positives (row-aligned)
                pl.BlockSpec((TK, D), lambda qi, ki: (ki, 0)),  # key / negative tiles
            ],
            out_specs=pl.BlockSpec((TQ, 1), lambda qi, ki: (qi, 0)),
            scratch_shapes=[
                pltpu.VMEM((TQ, D), op_dtype),      # normalized query tile
                pltpu.VMEM((TQ, 1), jnp.float32),   # running sum of exp(logit - 1/T)
                pltpu.VMEM((TQ, 1), jnp.float32),   # positive (target) logit
            ],
        ),
        compiler_params=pltpu.CompilerParams(
            dimension_semantics=("parallel", "arbitrary"),
            vmem_limit_bytes=32 * 1024 * 1024,      # fits v7x 64 MiB / v5e-v6e 128 MiB
        ),
        cost_estimate=cost,
    )(qp, pp, kp)

    per_row = nll[:N, 0]
    if reduction == 'mean':
        return jnp.mean(per_row)
    if reduction == 'sum':
        return jnp.sum(per_row)
    return per_row  # 'none'


# ---------------- pure-JAX reference (mirrors the PyTorch code) ----------------
def _ref_info_nce(query, positive_key, negative_keys=None, temperature=0.1):
    hp = lax.Precision.HIGHEST
    norm = lambda x: x / jnp.maximum(
        jnp.linalg.norm(x, axis=-1, keepdims=True), _EPS)
    q = norm(query.astype(jnp.float32))
    p = norm(positive_key.astype(jnp.float32))
    if negative_keys is not None:
        n = norm(negative_keys.astype(jnp.float32))
        pos = jnp.sum(q * p, axis=1, keepdims=True)
        negl = jnp.matmul(q, n.T, precision=hp)
        logits = jnp.concatenate([pos, negl], axis=1) / temperature
        labels = jnp.zeros((logits.shape[0],), dtype=jnp.int32)
    else:
        logits = jnp.matmul(q, p.T, precision=hp) / temperature
        labels = jnp.arange(logits.shape[0], dtype=jnp.int32)
    logz = jax.scipy.special.logsumexp(logits, axis=-1)
    nll = logz - jnp.take_along_axis(logits, labels[:, None], axis=1)[:, 0]
    return jnp.mean(nll)


if __name__ == "__main__":
    key = jax.random.PRNGKey(0)
    k1, k2, k3, k4, k5, k6 = jax.random.split(key, 6)

    def check(name, got, want, atol=1e-4, rtol=1e-4):
        got = jax.block_until_ready(got)
        assert jnp.allclose(got, want, atol=atol, rtol=rtol), (name, got, want)

    # Aligned small shapes (single block and multi-tile grid).
    N, M, D = 16, 48, 32
    q = jax.random.normal(k1, (N, D), dtype=jnp.float32)
    p = jax.random.normal(k2, (N, D), dtype=jnp.float32)
    n = jax.random.normal(k3, (M, D), dtype=jnp.float32)

    check("self", info_nce_loss(q, p, None), _ref_info_nce(q, p, None))
    check("unpaired", info_nce_loss(q, p, n), _ref_info_nce(q, p, n))
    # Multi-tile grid: exercises the online-logsumexp accumulation across key tiles.
    check("self_tiled", info_nce_loss(q, p, None, tq=8, tk=8),
          _ref_info_nce(q, p, None))
    check("unpaired_tiled", info_nce_loss(q, p, n, tq=8, tk=16),
          _ref_info_nce(q, p, n))

    # Ragged shapes: exercises row padding + key-column masking.
    N2, M2 = 12, 50
    q2 = jax.random.normal(k4, (N2, D), dtype=jnp.float32)
    p2 = jax.random.normal(k5, (N2, D), dtype=jnp.float32)
    n2 = jax.random.normal(k6, (M2, D), dtype=jnp.float32)
    check("self_ragged", info_nce_loss(q2, p2, None), _ref_info_nce(q2, p2, None))
    check("unpaired_ragged", info_nce_loss(q2, p2, n2), _ref_info_nce(q2, p2, n2))

    print("KERNEL_OK")
</pallas_src>

<mosaic_0001>
module attributes {stable_mosaic.version = 11 : i64} {
  func.func @_infonce_kernel(%arg0: i32, %arg1: i32, %arg2: memref<16x32xf32, #tpu.memory_space<vmem>>, %arg3: memref<16x32xf32, #tpu.memory_space<vmem>>, %arg4: memref<16x32xf32, #tpu.memory_space<vmem>>, %arg5: memref<16x1xf32, #tpu.memory_space<vmem>>, %arg6: memref<16x32xf32, #tpu.memory_space<vmem>>, %arg7: memref<16x1xf32, #tpu.memory_space<vmem>>, %arg8: memref<16x1xf32, #tpu.memory_space<vmem>>) attributes {dimension_semantics = [#tpu.dimension_semantics<parallel>, #tpu.dimension_semantics<arbitrary>], iteration_bounds = array<i64: 1, 1>, scalar_prefetch = 0 : i64, scratch_operands = 3 : i64, tpu.core_type = #tpu.core_type<tc>, window_params = [{transform_indices = @transform_0, window_bounds = array<i64: 16, 32>}, {transform_indices = @transform_1, window_bounds = array<i64: 16, 32>}, {transform_indices = @transform_2, window_bounds = array<i64: 16, 32>}, {transform_indices = @transform_3, window_bounds = array<i64: 16, 1>}]} {
    %c0_i32 = arith.constant 0 : i32
    %0 = arith.cmpi eq, %arg1, %c0_i32 : i32
    %1 = arith.extui %0 : i1 to i32
    %c0_i32_0 = arith.constant 0 : i32
    %2 = arith.cmpi ne, %1, %c0_i32_0 : i32
    scf.if %2 {
      %c0_15 = arith.constant 0 : index
      %c0_16 = arith.constant 0 : index
      %27 = vector.load %arg2[%c0_15, %c0_16] : memref<16x32xf32, #tpu.memory_space<vmem>>, vector<16x32xf32>
      %28 = arith.mulf %27, %27 : vector<16x32xf32>
      %cst_17 = arith.constant dense<0.000000e+00> : vector<16xf32>
      %29 = vector.multi_reduction <add>, %28, %cst_17 [1] : vector<16x32xf32> to vector<16xf32>
      %30 = vector.shape_cast %29 : vector<16xf32> to vector<16x1xf32>
      %cst_18 = arith.constant 1.000000e-24 : f32
      %31 = vector.broadcast %cst_18 : f32 to vector<16x1xf32>
      %32 = arith.maximumf %30, %31 : vector<16x1xf32>
      %33 = math.rsqrt %32 : vector<16x1xf32>
      %cst_19 = arith.constant 1.000000e+01 : f32
      %34 = vector.broadcast %cst_19 : f32 to vector<16x1xf32>
      %35 = arith.mulf %33, %34 : vector<16x1xf32>
      %36 = vector.broadcast %35 : vector<16x1xf32> to vector<16x32xf32>
      %37 = arith.mulf %27, %36 : vector<16x32xf32>
      %c0_20 = arith.constant 0 : index
      %c0_21 = arith.constant 0 : index
      %38 = vector.load %arg6[%c0_20, %c0_21] : memref<16x32xf32, #tpu.memory_space<vmem>>, vector<16x32xf32>
      tpu.vector_store %arg6[%c0_20, %c0_21], %37 {strides = array<i32>} : memref<16x32xf32, #tpu.memory_space<vmem>>, vector<16x32xf32>,
      %c0_22 = arith.constant 0 : index
      %c0_23 = arith.constant 0 : index
      %39 = vector.load %arg3[%c0_22, %c0_23] : memref<16x32xf32, #tpu.memory_space<vmem>>, vector<16x32xf32>
      %40 = arith.mulf %39, %39 : vector<16x32xf32>
      %cst_24 = arith.constant dense<0.000000e+00> : vector<16xf32>
      %41 = vector.multi_reduction <add>, %40, %cst_24 [1] : vector<16x32xf32> to vector<16xf32>
      %42 = vector.shape_cast %41 : vector<16xf32> to vector<16x1xf32>
      %cst_25 = arith.constant 1.000000e-24 : f32
      %43 = vector.broadcast %cst_25 : f32 to vector<16x1xf32>
      %44 = arith.maximumf %42, %43 : vector<16x1xf32>
      %45 = math.rsqrt %44 : vector<16x1xf32>
      %cst_26 = arith.constant 1.000000e+00 : f32
      %46 = vector.broadcast %cst_26 : f32 to vector<16x1xf32>
      %47 = arith.mulf %45, %46 : vector<16x1xf32>
      %48 = vector.broadcast %47 : vector<16x1xf32> to vector<16x32xf32>
      %49 = arith.mulf %39, %48 : vector<16x32xf32>
      %50 = arith.mulf %37, %49 : vector<16x32xf32>
      %cst_27 = arith.constant dense<0.000000e+00> : vector<16xf32>
      %51 = vector.multi_reduction <add>, %50, %cst_27 [1] : vector<16x32xf32> to vector<16xf32>
      %52 = vector.shape_cast %51 : vector<16xf32> to vector<16x1xf32>
      %c0_28 = arith.constant 0 : index
      %c0_29 = arith.constant 0 : index
      %53 = vector.load %arg8[%c0_28, %c0_29] : memref<16x1xf32, #tpu.memory_space<vmem>>, vector<16x1xf32>
      tpu.vector_store %arg8[%c0_28, %c0_29], %52 {strides = array<i32>} : memref<16x1xf32, #tpu.memory_space<vmem>>, vector<16x1xf32>,
      %cst_30 = arith.constant 0.000000e+00 : f32
      %54 = vector.broadcast %cst_30 : f32 to vector<16x1xf32>
      %c0_31 = arith.constant 0 : index
      %c0_32 = arith.constant 0 : index
      %55 = vector.load %arg7[%c0_31, %c0_32] : memref<16x1xf32, #tpu.memory_space<vmem>>, vector<16x1xf32>
      tpu.vector_store %arg7[%c0_31, %c0_32], %54 {strides = array<i32>} : memref<16x1xf32, #tpu.memory_space<vmem>>, vector<16x1xf32>,
    } else {
    }
    %c0 = arith.constant 0 : index
    %c0_1 = arith.constant 0 : index
    %3 = vector.load %arg4[%c0, %c0_1] : memref<16x32xf32, #tpu.memory_space<vmem>>, vector<16x32xf32>
    %4 = arith.mulf %3, %3 : vector<16x32xf32>
    %cst = arith.constant dense<0.000000e+00> : vector<16xf32>
    %5 = vector.multi_reduction <add>, %4, %cst [1] : vector<16x32xf32> to vector<16xf32>
    %6 = vector.shape_cast %5 : vector<16xf32> to vector<16x1xf32>
    %cst_2 = arith.constant 1.000000e-24 : f32
    %7 = vector.broadcast %cst_2 : f32 to vector<16x1xf32>
    %8 = arith.maximumf %6, %7 : vector<16x1xf32>
    %9 = math.rsqrt %8 : vector<16x1xf32>
    %cst_3 = arith.constant 1.000000e+00 : f32
    %10 = vector.broadcast %cst_3 : f32 to vector<16x1xf32>
    %11 = arith.mulf %9, %10 : vector<16x1xf32>
    %12 = vector.broadcast %11 : vector<16x1xf32> to vector<16x32xf32>
    %13 = arith.mulf %3, %12 : vector<16x32xf32>
    %c0_4 = arith.constant 0 : index
    %c0_5 = arith.constant 0 : index
    %14 = vector.load %arg6[%c0_4, %c0_5] : memref<16x32xf32, #tpu.memory_space<vmem>>, vector<16x32xf32>
    %cst_6 = arith.constant dense<0.000000e+00> : vector<16x16xf32>
    %15 = tpu.matmul %14, %13, %cst_6 {dimension_numbers = #tpu.dot_dimension_numbers<[1], [1], [0], [0], [0, 0, 1, 0], [], []>} : vector<16x32xf32>, vector<16x32xf32>, vector<16x16xf32> -> vector<16x16xf32>
    %cst_7 = arith.constant 1.000000e+01 : f32
    %16 = vector.broadcast %cst_7 : f32 to vector<16x16xf32>
    %17 = arith.subf %15, %16 : vector<16x16xf32>
    %18 = math.exp %17 : vector<16x16xf32>
    %c0_8 = arith.constant 0 : index
    %c0_9 = arith.constant 0 : index
    %19 = vector.load %arg7[%c0_8, %c0_9] : memref<16x1xf32, #tpu.memory_space<vmem>>, vector<16x1xf32>
    %cst_10 = arith.constant dense<0.000000e+00> : vector<16xf32>
    %20 = vector.multi_reduction <add>, %18, %cst_10 [1] : vector<16x16xf32> to vector<16xf32>
    %21 = vector.shape_cast %20 : vector<16xf32> to vector<16x1xf32>
    %22 = arith.addf %19, %21 : vector<16x1xf32>
    %c0_11 = arith.constant 0 : index
    %c0_12 = arith.constant 0 : index
    %23 = vector.load %arg7[%c0_11, %c0_12] : memref<16x1xf32, #tpu.memory_space<vmem>>, vector<16x1xf32>
    tpu.vector_store %arg7[%c0_11, %c0_12], %22 {strides = array<i32>} : memref<16x1xf32, #tpu.memory_space<vmem>>, vector<16x1xf32>,
    %c0_i32_13 = arith.constant 0 : i32
    %24 = arith.cmpi eq, %arg1, %c0_i32_13 : i32
    %25 = arith.extui %24 : i1 to i32
    %c0_i32_14 = arith.constant 0 : i32
    %26 = arith.cmpi ne, %25, %c0_i32_14 : i32
    scf.if %26 {
      %c0_15 = arith.constant 0 : index
      %c0_16 = arith.constant 0 : index
      %27 = vector.load %arg7[%c0_15, %c0_16] : memref<16x1xf32, #tpu.memory_space<vmem>>, vector<16x1xf32>
      %28 = math.log %27 : vector<16x1xf32>
      %cst_17 = arith.constant 1.000000e+01 : f32
      %29 = vector.broadcast %cst_17 : f32 to vector<16x1xf32>
      %30 = arith.addf %28, %29 : vector<16x1xf32>
      %c0_18 = arith.constant 0 : index
      %c0_19 = arith.constant 0 : index
      %31 = vector.load %arg8[%c0_18, %c0_19] : memref<16x1xf32, #tpu.memory_space<vmem>>, vector<16x1xf32>
      %32 = arith.subf %30, %31 : vector<16x1xf32>
      %c0_20 = arith.constant 0 : index
      %c0_21 = arith.constant 0 : index
      %33 = vector.load %arg5[%c0_20, %c0_21] : memref<16x1xf32, #tpu.memory_space<vmem>>, vector<16x1xf32>
      tpu.vector_store %arg5[%c0_20, %c0_21], %32 {strides = array<i32>} : memref<16x1xf32, #tpu.memory_space<vmem>>, vector<16x1xf32>,
    } else {
    }
    return
  }
  func.func @transform_0(%arg0: i32, %arg1: i32) -> (i32, i32) {
    %c0_i32 = arith.constant 0 : i32
    %c0_i32_0 = arith.constant 0 : i32
    return %arg0, %c0_i32 : i32, i32
  }
  func.func @transform_1(%arg0: i32, %arg1: i32) -> (i32, i32) {
    %c0_i32 = arith.constant 0 : i32
    %c0_i32_0 = arith.constant 0 : i32
    return %arg0, %c0_i32 : i32, i32
  }
  func.func @transform_2(%arg0: i32, %arg1: i32) -> (i32, i32) {
    %c0_i32 = arith.constant 0 : i32
    %c0_i32_0 = arith.constant 0 : i32
    return %arg1, %c0_i32 : i32, i32
  }
  func.func @transform_3(%arg0: i32, %arg1: i32) -> (i32, i32) {
    %c0_i32 = arith.constant 0 : i32
    %c0_i32_0 = arith.constant 0 : i32
    return %arg0, %c0_i32 : i32, i32
  }
}

</mosaic_0001>

<llo_original>
// kernel: tpu_custom_call.1
$region0: #{tpu_custom_call.1}
  #allocation0 [shape = 'u32[]', space=smem, size = 0x4, offset = 0x4, fixed_abs, tag = 'smem constant byte address 0x4 - core index']
  #allocation1 [shape = 'u32[72,128]{1,0:T(1,128)}', space=vmem, size = 0x9000, scoped, tag = 'internal scratch']
  #allocation2 [shape = 'f32[16,32]{1,0:T(8,128)}', space=vmem, size = 0x2000, scoped, tag = 'scratch operand']
  #allocation3 [shape = 'f32[16,1]{1,0:T(8,128)}', space=vmem, size = 0x2000, scoped, tag = 'scratch operand']
  #allocation4 [shape = 'f32[16,1]{1,0:T(8,128)}', space=vmem, size = 0x2000, scoped, tag = 'scratch operand']
  %s0 = inlined_call_operand.hbm [shape: f32[16,32], index: 0, kind: input, shape index: {}]
  %s1 = inlined_call_operand.hbm [shape: f32[16,32], index: 1, kind: input, shape index: {}]
  %s2 = inlined_call_operand.hbm [shape: f32[16,32], index: 2, kind: input, shape index: {}]
  %s3 = inlined_call_operand.vmem [shape: f32[16,1], index: 3, kind: output, shape index: {}]
  %s4 = sld [smem:[#allocation0]]
  $region42: #{tpu_custom_call.1} parent=0
    _
  %s6 = ssub.s32 1, %s4
  %s7 = scalar_select 0, %s6, %s4
  $region1: #{tpu_custom_call.1} parent=0
    #allocation5 [shape = 'u8[8192]{0}', space=vmem, size = 0x2000, scoped, tag = 'input window, operand 0, single buffered']
    #allocation6 [shape = 's32[1]{0}', space=sflag, size = 0x4, scoped, tag = 'scoped memory for tpu_custom_call.1']
    #allocation7 [shape = 'u8[8192]{0}', space=vmem, size = 0x2000, scoped, tag = 'input window, operand 1, single buffered']
    #allocation8 [shape = 's32[1]{0}', space=sflag, size = 0x4, scoped, tag = 'scoped memory for tpu_custom_call.1']
    #allocation9 [shape = 'u8[8192]{0}', space=vmem, size = 0x2000, scoped, tag = 'input window, operand 2, single buffered']
    %8 = vsyncpa [#allocation6], 0
    %9 = vsyncpa [#allocation8], 0
    // Predicated region
    $region2: #{tpu_custom_call.1} parent=1 // pred_check
      _
    $region3: #{tpu_custom_call.1} parent=1 // pred_check_branch
      %11 = sbr.rel (0) target = $region5
    $region4: #{tpu_custom_call.1} parent=1 // pred_region
      %13 = vsyncadd [#allocation6], 0
      %s14 = sshll.u32 %s0, 4
      %s15 = int_to_ptr.hbm [resolvable:$true] %s14
      %s16 = sshll.u32 [#allocation5], 4
      %s17 = int_to_ptr.vmem [resolvable:$true] %s16
      %22 = dma.hbm_to_vmem [thread:$0]  %s15, 256, %s17, [#allocation6], 128, 128, 8
    $region5: #{tpu_custom_call.1} parent=1 // pred_fallthru
      _
    // Predicated region
    $region6: #{tpu_custom_call.1} parent=1 // pred_check
      _
    $region7: #{tpu_custom_call.1} parent=1 // pred_check_branch
      %24 = sbr.rel (0) target = $region9
    $region8: #{tpu_custom_call.1} parent=1 // pred_region
      %26 = vsyncadd [#allocation8], 0
      %s27 = sshll.u32 %s1, 4
      %s28 = int_to_ptr.hbm [resolvable:$true] %s27
      %s29 = sshll.u32 [#allocation7], 4
      %s30 = int_to_ptr.vmem [resolvable:$true] %s29
      %35 = dma.hbm_to_vmem [thread:$0]  %s28, 256, %s30, [#allocation8], 128, 128, 8
    $region9: #{tpu_custom_call.1} parent=1 // pred_fallthru
      _
    // Predicated region
    $region10: #{tpu_custom_call.1} parent=1 // pred_check
      _
    $region11: #{tpu_custom_call.1} parent=1 // pred_check_branch
      %37 = sbr.rel (0) target = $region13
    $region12: #{tpu_custom_call.1} parent=1 // pred_region
      %39 = vsyncadd [#allocation8], 0
      %s40 = sshll.u32 %s2, 4
      %s41 = int_to_ptr.hbm [resolvable:$true] %s40
      %s42 = sshll.u32 [#allocation9], 4
      %s43 = int_to_ptr.vmem [resolvable:$true] %s42
      %48 = dma.hbm_to_vmem [thread:$0]  %s41, 256, %s43, [#allocation8], 128, 128, 8
    $region13: #{tpu_custom_call.1} parent=1 // pred_fallthru
      _
    // Predicated region
    $region14: #{tpu_custom_call.1} parent=1 // pred_check
      _
    $region15: #{tpu_custom_call.1} parent=1 // pred_check_branch
      %50 = sbr.rel (0) target = $region17
    $region16: #{tpu_custom_call.1} parent=1 // pred_region
      %52 = dma.done [#allocation6], 256
    $region17: #{tpu_custom_call.1} parent=1 // pred_fallthru
      _
    // Predicated region
    $region18: #{tpu_custom_call.1} parent=1 // pred_check
      _
    $region19: #{tpu_custom_call.1} parent=1 // pred_check_branch
      %54 = sbr.rel (0) target = $region21
    $region20: #{tpu_custom_call.1} parent=1 // pred_region
      %56 = dma.done [#allocation8], 256
    $region21: #{tpu_custom_call.1} parent=1 // pred_fallthru
      _
    // Predicated region
    $region22: #{tpu_custom_call.1} parent=1 // pred_check
      _
    $region23: #{tpu_custom_call.1} parent=1 // pred_check_branch
      %58 = sbr.rel (0) target = $region25
    $region24: #{tpu_custom_call.1} parent=1 // pred_region
      %60 = dma.done [#allocation8], 256
    $region25: #{tpu_custom_call.1} parent=1 // pred_fallthru
      _
    %p61 = scmp.eq.s32.totalorder 0, 0
    // Predicated region
    $region26: #{tpu_custom_call.1} parent=1 // pred_check
      %p62 = pneg %p61
    $region27: #{tpu_custom_call.1} parent=1 // pred_check_branch
      %64 = sbr.rel (%p62) target = $region29
    $region28: #{tpu_custom_call.1} parent=1 // pred_region
      %v65 = vld [vmem:[#allocation5] sm:$0xff]
      %v66 = vld [vmem:[#allocation5 + $0x8] sm:$0xff]
      %v67 = vmul.f32 %v65, %v65
      %v68 = vmul.f32 %v66, %v66
      %vm69 = vcmask 261120
      %v70 = vsel %vm69, %v67, 0.0
      %71 = vadd.xlane.f32.xlu0 %v70
      %v72 = vpop.xlane.xlu0 %71
      %v73 = vsel %vm69, %v68, 0.0
      %74 = vadd.xlane.f32.xlu0 %v73
      %v75 = vpop.xlane.xlu0 %74
      %v76 = vmax.f32 %v72, 1e-24
      %v77 = vmax.f32 %v75, 1e-24
      %v78 = vrsqrt.pop %v76
      %v79 = vmul.f32 %v78, %v76
      %v80 = vmul.f32 %v79, %v78
      %v81 = vmul.f32 0.5, %v80
      %v82 = vsub.f32 1.5, %v81
      %v83 = vmul.f32 %v78, %v82
      %vm84 = vweird.f32 %v76
      %vm85 = vweird.f32 %v78
      %vm86 = vmor %vm84, %vm85
      %v87 = vsel %vm86, %v78, %v83
      %v88 = vrsqrt.pop %v77
      %v89 = vmul.f32 %v88, %v77
      %v90 = vmul.f32 %v89, %v88
      %v91 = vmul.f32 0.5, %v90
      %v92 = vsub.f32 1.5, %v91
      %v93 = vmul.f32 %v88, %v92
      %vm94 = vweird.f32 %v77
      %vm95 = vweird.f32 %v88
      %vm96 = vmor %vm94, %vm95
      %v97 = vsel %vm96, %v88, %v93
      %v98 = vmul.f32 %v87, 10.0
      %v99 = vmul.f32 %v97, 10.0
      %v100 = vmul.f32 %v65, %v98
      %v101 = vmul.f32 %v66, %v99
      %102 = vst.msk [vmem:[#allocation2] sm:$0xff] %vm69, %v100
      %103 = vst.msk [vmem:[#allocation2 + $0x8] sm:$0xff] %vm69, %v101
      %v104 = vld [vmem:[#allocation7] sm:$0xff]
      %v105 = vld [vmem:[#allocation7 + $0x8] sm:$0xff]
      %v106 = vmul.f32 %v104, %v104
      %v107 = vmul.f32 %v105, %v105
      %v108 = vsel %vm69, %v106, 0.0
      %109 = vadd.xlane.f32.xlu0 %v108
      %v110 = vpop.xlane.xlu0 %109
      %v111 = vsel %vm69, %v107, 0.0
      %112 = vadd.xlane.f32.xlu0 %v111
      %v113 = vpop.xlane.xlu0 %112
      %v114 = vmax.f32 %v110, 1e-24
      %v115 = vmax.f32 %v113, 1e-24
      %v116 = vrsqrt.pop %v114
      %v117 = vmul.f32 %v116, %v114
      %v118 = vmul.f32 %v117, %v116
      %v119 = vmul.f32 0.5, %v118
      %v120 = vsub.f32 1.5, %v119
      %v121 = vmul.f32 %v116, %v120
      %vm122 = vweird.f32 %v114
      %vm123 = vweird.f32 %v116
      %vm124 = vmor %vm122, %vm123
      %v125 = vsel %vm124, %v116, %v121
      %v126 = vrsqrt.pop %v115
      %v127 = vmul.f32 %v126, %v115
      %v128 = vmul.f32 %v127, %v126
      %v129 = vmul.f32 0.5, %v128
      %v130 = vsub.f32 1.5, %v129
      %v131 = vmul.f32 %v126, %v130
      %vm132 = vweird.f32 %v115
      %vm133 = vweird.f32 %v126
      %vm134 = vmor %vm132, %vm133
      %v135 = vsel %vm134, %v126, %v131
      %v136 = vmul.f32 %v104, %v125
      %v137 = vmul.f32 %v105, %v135
      %v138 = vmul.f32 %v100, %v136
      %v139 = vmul.f32 %v101, %v137
      %v140 = vsel %vm69, %v138, 0.0
      %141 = vadd.xlane.f32.xlu0 %v140
      %v142 = vpop.xlane.xlu0 %141
      %v143 = vsel %vm69, %v139, 0.0
      %144 = vadd.xlane.f32.xlu0 %v143
      %v145 = vpop.xlane.xlu0 %144
      %vm146 = vcmask 7168
      %147 = vst.msk [vmem:[#allocation4] sm:$0xff] %vm146, %v142
      %148 = vst.msk [vmem:[#allocation4 + $0x8] sm:$0xff] %vm146, %v145
      %149 = vst.msk [vmem:[#allocation3] sm:$0xff] %vm146, 0.0
      %150 = vst.msk [vmem:[#allocation3 + $0x8] sm:$0xff] %vm146, 0.0
    $region29: #{tpu_custom_call.1} parent=1 // pred_fallthru
      _
    %v151 = vld [vmem:[#allocation9] sm:$0xff]
    %v152 = vld [vmem:[#allocation9 + $0x8] sm:$0xff]
    %v153 = vmul.f32 %v151, %v151
    %v154 = vmul.f32 %v152, %v152
    %vm155 = vcmask 261120
    %v156 = vsel %vm155, %v153, 0.0
    %157 = vadd.xlane.f32.xlu0 %v156
    %v158 = vpop.xlane.xlu0 %157
    %v159 = vsel %vm155, %v154, 0.0
    %160 = vadd.xlane.f32.xlu0 %v159
    %v161 = vpop.xlane.xlu0 %160
    %v162 = vmax.f32 %v158, 1e-24
    %v163 = vmax.f32 %v161, 1e-24
    %v164 = vrsqrt.pop %v162
    %v165 = vmul.f32 %v164, %v162
    %v166 = vmul.f32 %v165, %v164
    %v167 = vmul.f32 0.5, %v166
    %v168 = vsub.f32 1.5, %v167
    %v169 = vmul.f32 %v164, %v168
    %vm170 = vweird.f32 %v162
    %vm171 = vweird.f32 %v164
    %vm172 = vmor %vm170, %vm171
    %v173 = vsel %vm172, %v164, %v169
    %v174 = vrsqrt.pop %v163
    %v175 = vmul.f32 %v174, %v163
    %v176 = vmul.f32 %v175, %v174
    %v177 = vmul.f32 0.5, %v176
    %v178 = vsub.f32 1.5, %v177
    %v179 = vmul.f32 %v174, %v178
    %vm180 = vweird.f32 %v163
    %vm181 = vweird.f32 %v174
    %vm182 = vmor %vm180, %vm181
    %v183 = vsel %vm182, %v174, %v179
    %v184 = vmul.f32 %v151, %v173
    %v185 = vmul.f32 %v152, %v183
    %v186 = vld [vmem:[#allocation2] sm:$0xff]
    %v187 = vld [vmem:[#allocation2 + $0x8] sm:$0xff]
    %v189 = vsel %vm155, %v186, 0
    %v192 = vsel %vm155, %v187, 0
    %v195 = vsel %vm155, %v184, 0
    %v198 = vsel %vm155, %v185, 0
    %200 = vmatpush.xpose.msra.mxu0 0.0
    %201 = vmatpush.xpose.msra.mxu0 0.0
    %202 = vmatpush.xpose.msra.mxu0 0.0
    %203 = vmatpush.xpose.msra.mxu0 0.0
    %204 = vmatpush.xpose.msra.mxu0 0.0
    %205 = vmatpush.xpose.msra.mxu0 0.0
    %206 = vmatpush.xpose.msra.mxu0 0.0
    %207 = vmatpush.xpose.msra.mxu0 0.0
    %208 = vmatpush.xpose.msra.mxu0 0.0
    %209 = vmatpush.xpose.msra.mxu0 0.0
    %210 = vmatpush.xpose.msra.mxu0 0.0
    %211 = vmatpush.xpose.msra.mxu0 0.0
    %212 = vmatpush.xpose.msra.mxu0 0.0
    %213 = vmatpush.xpose.msra.mxu0 0.0
    %214 = vmatpush.xpose.msra.mxu0 %v198
    %215 = vmatpush.xpose.msra.mxu0 %v195
    %216 = vmatmul.f32.gmra.mxu0 %v189
    %v217 = vpop.f32.mrf.mxu0
    %v218 = vadd.f32 0.0, %v217
    %219 = vmatmul.f32.gmra.mxu0 %v192
    %v220 = vpop.f32.mrf.mxu0
    %v221 = vadd.f32 0.0, %v220
    %222 = vdwg.mxu0
    %v223 = vsub.f32 %v218, 10.0
    %v224 = vsub.f32 %v221, 10.0
    %v225 = vmul.f32 %v223, 1.442695
    %v226 = vpow.pop %v225
    %v227 = vmul.f32 %v224, 1.442695
    %v228 = vpow.pop %v227
    %v229 = vld [vmem:[#allocation3] sm:$0xff]
    %v230 = vld [vmem:[#allocation3 + $0x8] sm:$0xff]
    %vm231 = vcmask 130048
    %v232 = vsel %vm231, %v226, 0.0
    %233 = vadd.xlane.f32.xlu0 %v232
    %v234 = vpop.xlane.xlu0 %233
    %v235 = vsel %vm231, %v228, 0.0
    %236 = vadd.xlane.f32.xlu0 %v235
    %v237 = vpop.xlane.xlu0 %236
    %v238 = vadd.f32 %v229, %v234
    %v239 = vadd.f32 %v230, %v237
    %vm240 = vcmask 7168
    %241 = vst.msk [vmem:[#allocation3] sm:$0xff] %vm240, %v238
    %242 = vst.msk [vmem:[#allocation3 + $0x8] sm:$0xff] %vm240, %v239
    // Predicated region
    $region30: #{tpu_custom_call.1} parent=1 // pred_check
      %p243 = pneg %p61
    $region31: #{tpu_custom_call.1} parent=1 // pred_check_branch
      %245 = sbr.rel (%p243) target = $region33
    $region32: #{tpu_custom_call.1} parent=1 // pred_region
      %v246 = vld [vmem:[#allocation3] sm:$0xff]
      %v247 = vld [vmem:[#allocation3 + $0x8] sm:$0xff]
      %v248 = vlog2.pop %v246
      %v249 = vmul.f32 %v248, 0.6931472
      %v250 = vlog2.pop %v247
      %v251 = vmul.f32 %v250, 0.6931472
      %v252 = vadd.f32 %v249, 10.0
      %v253 = vadd.f32 %v251, 10.0
      %v254 = vld [vmem:[#allocation4] sm:$0xff]
      %v255 = vld [vmem:[#allocation4 + $0x8] sm:$0xff]
      %v256 = vsub.f32 %v252, %v254
      %v257 = vsub.f32 %v253, %v255
      %258 = vst.msk [vmem:[%s3] sm:$0xff] %vm240, %v256
      %259 = vst.msk [vmem:[%s3 + $0x8] sm:$0xff] %vm240, %v257
    $region33: #{tpu_custom_call.1} parent=1 // pred_fallthru
      _
    // Predicated region
    $region34: #{tpu_custom_call.1} parent=1 // pred_check
      _
    $region35: #{tpu_custom_call.1} parent=1 // pred_check_branch
      %261 = sbr.rel (0) target = $region37
    $region36: #{tpu_custom_call.1} parent=1 // pred_region
      _
    $region37: #{tpu_custom_call.1} parent=1 // pred_fallthru
      _
    // Predicated region
    $region38: #{tpu_custom_call.1} parent=1 // pred_check
      _
    $region39: #{tpu_custom_call.1} parent=1 // pred_check_branch
      %263 = sbr.rel (0) target = $region41
    $region40: #{tpu_custom_call.1} parent=1 // pred_region
      _
    $region41: #{tpu_custom_call.1} parent=1 // pred_fallthru
      _
    %264 = vsyncpa [#allocation6], 1
    %265 = vsyncpa [#allocation8], 1

</llo_original>
